<compile_context>
chip_gen: v6e
topology: v6e:2x2x1
jax: 0.10.0
libtpu: 0.0.40
codegen_flags: <defaults>
</compile_context>

<pallas_src>
import functools
import math

import numpy as np

import jax
import jax.numpy as jnp
from jax import lax
from jax.experimental import pallas as pl
from jax.experimental.pallas import tpu as pltpu


_MIN_PALLAS_BYTES = 1 << 20           # below this, plain XLA is faster
_CHUNK_ROWS = 512                     # packed rows per in-kernel reduce chunk
_VMEM_BUDGET = 24 * 1024 * 1024       # per-block working-set target
_VMEM_LIMIT = 32 * 1024 * 1024        # scoped-VMEM limit handed to Mosaic


def _round_up(n: int, m: int) -> int:
    return ((n + m - 1) // m) * m


def _logpx_kernel(x_ref, sel_ref, o_ref, *, log_z: float, chunk: int, align: int):
    """x_ref: (tb, G*nd) native dtype; sel_ref: (G*nd, G) f32 block-diagonal
    selector holding -0.5 on its own segment; o_ref: (tb, G) f32."""
    tb = x_ref.shape[0]
    sel = sel_ref[...]
    nchunks = -(-tb // chunk)         # static ceil-div

    def body(c, carry):
        # Clamp so a (possibly partial) last chunk re-covers earlier rows
        # instead of stepping out of bounds; the overwrite is idempotent.
        r0 = jnp.minimum(c * chunk, tb - chunk)
        r0 = pl.multiple_of(r0, align)          # guaranteed by block sizing
        xb = x_ref[pl.ds(r0, chunk), :].astype(jnp.float32)
        # (chunk, G*nd) @ (G*nd, G) block-diagonal selector == per-batch-row
        # -0.5 * sum(x**2), done on the MXU (no lane relayout needed).
        half_neg_r2 = jnp.dot(xb * xb, sel, preferred_element_type=jnp.float32)
        o_ref[pl.ds(r0, chunk), :] = half_neg_r2 + log_z
        return carry

    lax.fori_loop(0, nchunks, body, 0)


def _choose_block_rows(rows: int, width: int, g: int, itemsize: int,
                       align: int) -> int:
    """VMEM-correct block sizing (see module header)."""
    chunk = min(_CHUNK_ROWS, rows)
    in_row = width * itemsize                         # lane-dense, no padding
    out_row = 2 * _round_up(g, 128) * 4               # double-buffered, lane-padded
    sel_bytes = 2 * width * _round_up(g, 128) * 4     # resident selector
    temp_bytes = 2 * chunk * width * 4                # f32 upcast + square, chunk-bounded
    avail = _VMEM_BUDGET - sel_bytes - temp_bytes
    per_row = 2 * in_row + out_row                    # double-buffered input + output
    tb = max(align, avail // per_row)
    if rows > 2 * _CHUNK_ROWS:
        # Keep >= 2 grid steps so ("parallel",) can use both v7x TensorCores.
        tb = min(tb, -(-rows // 2))
    if tb >= rows:
        return int(rows)                              # single full-extent block
    # Multi-block: keep the static block a multiple of the chunk size when it
    # spans multiple chunks (keeps dynamic sublane slice starts tile-aligned),
    # otherwise a multiple of the sublane alignment.
    if tb >= _CHUNK_ROWS:
        tb = (tb // _CHUNK_ROWS) * _CHUNK_ROWS
    else:
        tb = max(align, (tb // align) * align)
    return int(tb)


def _reference_log_likelihood(x: jax.Array) -> jax.Array:
    """Pure-JAX reference mirroring the PyTorch function exactly."""
    _, N, D = x.shape
    r2 = jnp.sum(x.astype(jnp.float32) ** 2, axis=(1, 2))
    dof = (N - 1) * D
    log_z = -0.5 * dof * math.log(2.0 * math.pi)
    return -0.5 * r2 + log_z


def position_prior_log_likelihood(x: jax.Array, *, block_rows=None,
                                  force_pallas: bool = False) -> jax.Array:
    """Pallas implementation of PositionPrior.forward(x).

    Args:
      x: (B, N, D) array with zero center of gravity along axis 1.
      block_rows: optional override of packed rows per grid step (testing).
      force_pallas: skip the tiny-input XLA fallback (testing).
    Returns:
      (B,) float32 array of log-likelihoods.
    """
    assert x.ndim == 3, "expected (B, N, D)"
    B, N, D = x.shape
    nd = N * D
    dof = (N - 1) * D
    log_z = -0.5 * dof * math.log(2.0 * math.pi)

    itemsize = int(jnp.dtype(x.dtype).itemsize)
    if not force_pallas and B * nd * itemsize < _MIN_PALLAS_BYTES:
        # pallas_call launch / DMA-setup overhead dominates tiny inputs.
        return _reference_log_likelihood(x)

    # ---- Lane-dense repack: G consecutive batch rows per packed row. --------
    g = 128 // math.gcd(nd, 128)          # smallest G with (G*nd) % 128 == 0
    width = g * nd
    align = max(8, 32 // itemsize)        # sublane alignment for this dtype
    rows = max(align, _round_up(-(-B // g), align))
    b_pad = rows * g

    x2d = x.reshape(B, nd)
    if b_pad != B:
        # Zero padding only contributes log_Z values in slots sliced off below.
        x2d = jnp.pad(x2d, ((0, b_pad - B), (0, 0)))
    xp = x2d.reshape(rows, width)         # free row-major reshape

    # Block-diagonal selector with the -0.5 factor folded in:
    #   sel[k, j] = -0.5 if k // nd == j else 0.
    seg = np.repeat(np.arange(g), nd)
    sel_np = np.where(seg[:, None] == np.arange(g)[None, :], -0.5, 0.0)
    sel = jnp.asarray(sel_np.astype(np.float32))

    # ---- Block sizing --------------------------------------------------------
    if block_rows is None:
        tb = _choose_block_rows(rows, width, g, itemsize, align)
    else:
        tb = min(max(int(block_rows), 1), rows)
        if tb < rows:
            tb = min(rows, max(align, (tb // align) * align))
    chunk = min(_CHUNK_ROWS, tb)
    num_blocks = -(-rows // tb)

    kernel = functools.partial(_logpx_kernel, log_z=log_z, chunk=chunk,
                               align=align)

    out = pl.pallas_call(
        kernel,
        out_shape=jax.ShapeDtypeStruct((num_blocks * tb, g), jnp.float32),
        grid_spec=pl.GridSpec(
            grid=(num_blocks,),
            in_specs=[
                pl.BlockSpec((tb, width), lambda b: (b, 0)),
                pl.BlockSpec((width, g), lambda b: (0, 0)),   # constant block
            ],
            out_specs=pl.BlockSpec((tb, g), lambda b: (b, 0)),
        ),
        compiler_params=pltpu.CompilerParams(
            dimension_semantics=("parallel",),
            vmem_limit_bytes=_VMEM_LIMIT,
        ),
        cost_estimate=pl.CostEstimate(
            flops=2 * b_pad * nd * (1 + g),
            transcendentals=0,
            bytes_accessed=int(b_pad * nd * itemsize + b_pad * 4 + sel.size * 4),
        ),
    )(xp, sel)

    # Row-major flatten maps packed (row r, segment j) -> batch index r*g + j;
    # all zero-padded / out-of-range slots land at indices >= B and are sliced.
    return out.reshape(-1)[:B]


if __name__ == "__main__":
    # Case 1: canonical tiny prior input (batch=2, nodes=8, dim=3), forced
    # through the Pallas path (the auto path would take the XLA fallback).
    B, N, D = 2, 8, 3
    x = jax.random.normal(jax.random.PRNGKey(0), (B, N, D), dtype=jnp.float32)
    x = x - jnp.mean(x, axis=1, keepdims=True)        # zero center of gravity
    got = jax.block_until_ready(
        position_prior_log_likelihood(x, force_pallas=True))
    ref = _reference_log_likelihood(x)
    assert got.shape == (B,)
    assert jnp.allclose(got, ref, atol=1e-5, rtol=1e-5), (got, ref)

    # Case 2: multi-block grid with batch padding (B % G != 0): B=200 -> 16
    # packed rows, block_rows=8 -> 2 grid steps.
    B2, N2, D2 = 200, 8, 3
    x2 = jax.random.normal(jax.random.PRNGKey(0), (B2, N2, D2), dtype=jnp.float32)
    x2 = x2 - jnp.mean(x2, axis=1, keepdims=True)
    got2 = jax.block_until_ready(
        position_prior_log_likelihood(x2, block_rows=8, force_pallas=True))
    ref2 = _reference_log_likelihood(x2)
    assert got2.shape == (B2,)
    assert jnp.allclose(got2, ref2, atol=1e-5, rtol=1e-5), (got2, ref2)

    # Case 3: bf16 input (native-dtype DMA, f32 accumulation in-kernel).
    B3, N3, D3 = 64, 8, 3
    x3 = jax.random.normal(jax.random.PRNGKey(1), (B3, N3, D3), dtype=jnp.float32)
    x3 = (x3 - jnp.mean(x3, axis=1, keepdims=True)).astype(jnp.bfloat16)
    got3 = jax.block_until_ready(
        position_prior_log_likelihood(x3, force_pallas=True))
    ref3 = _reference_log_likelihood(x3)
    assert got3.shape == (B3,)
    assert jnp.allclose(got3, ref3, atol=1e-3, rtol=1e-3), (got3, ref3)

    print("KERNEL_OK")
</pallas_src>

<mosaic_0001>
module attributes {stable_mosaic.version = 11 : i64} {
  func.func @_logpx_kernel(%arg0: i32, %arg1: memref<8x384xf32, #tpu.memory_space<vmem>>, %arg2: memref<384x16xf32, #tpu.memory_space<vmem>>, %arg3: memref<8x16xf32, #tpu.memory_space<vmem>>) attributes {dimension_semantics = [#tpu.dimension_semantics<parallel>], iteration_bounds = array<i64: 1>, scalar_prefetch = 0 : i64, scratch_operands = 0 : i64, tpu.core_type = #tpu.core_type<tc>, window_params = [{transform_indices = @transform_0, window_bounds = array<i64: 8, 384>}, {pipeline_mode = #tpu.pipeline_mode<synchronous>, transform_indices = @transform_1, window_bounds = array<i64: 384, 16>}, {transform_indices = @transform_2, window_bounds = array<i64: 8, 16>}]} {
    %c0 = arith.constant 0 : index
    %c0_0 = arith.constant 0 : index
    %0 = vector.load %arg2[%c0, %c0_0] : memref<384x16xf32, #tpu.memory_space<vmem>>, vector<384x16xf32>
    %c0_i32 = arith.constant 0 : i32
    %c8_i32 = arith.constant 8 : i32
    %1 = arith.muli %c0_i32, %c8_i32 : i32
    %c0_i32_1 = arith.constant 0 : i32
    %2 = arith.minsi %1, %c0_i32_1 : i32
    %3 = tpu.assume_multiple %2, 8 : i32
    %4 = arith.index_cast %3 : i32 to index
    %c0_2 = arith.constant 0 : index
    %5 = vector.load %arg1[%4, %c0_2] : memref<8x384xf32, #tpu.memory_space<vmem>>, vector<8x384xf32>
    %6 = arith.mulf %5, %5 : vector<8x384xf32>
    %cst = arith.constant dense<0.000000e+00> : vector<8x16xf32>
    %7 = tpu.matmul %6, %0, %cst {dimension_numbers = #tpu.dot_dimension_numbers<[1], [0], [0], [1], [0, 0, 1, 1], [], []>} : vector<8x384xf32>, vector<384x16xf32>, vector<8x16xf32> -> vector<8x16xf32>
    %cst_3 = arith.constant -19.2977085 : f32
    %8 = vector.broadcast %cst_3 : f32 to vector<8x16xf32>
    %9 = arith.addf %7, %8 : vector<8x16xf32>
    %10 = arith.index_cast %3 : i32 to index
    %c0_4 = arith.constant 0 : index
    %11 = vector.load %arg3[%10, %c0_4] : memref<8x16xf32, #tpu.memory_space<vmem>>, vector<8x16xf32>
    tpu.vector_store %arg3[%10, %c0_4], %9 {strides = array<i32>} : memref<8x16xf32, #tpu.memory_space<vmem>>, vector<8x16xf32>,
    %c1_i32 = arith.constant 1 : i32
    return
  }
  func.func @transform_0(%arg0: i32) -> (i32, i32) {
    %c0_i32 = arith.constant 0 : i32
    %c0_i32_0 = arith.constant 0 : i32
    return %arg0, %c0_i32 : i32, i32
  }
  func.func @transform_1(%arg0: i32) -> (i32, i32) {
    %c0_i32 = arith.constant 0 : i32
    %c0_i32_0 = arith.constant 0 : i32
    %c0_i32_1 = arith.constant 0 : i32
    return %c0_i32, %c0_i32_0 : i32, i32
  }
  func.func @transform_2(%arg0: i32) -> (i32, i32) {
    %c0_i32 = arith.constant 0 : i32
    %c0_i32_0 = arith.constant 0 : i32
    return %arg0, %c0_i32 : i32, i32
  }
}

</mosaic_0001>

<llo_original>
// kernel: tpu_custom_call.1
$region0: #{tpu_custom_call.1}
  #allocation0 [shape = 'u32[]', space=smem, size = 0x4, offset = 0x4, fixed_abs, tag = 'smem constant byte address 0x4 - core index']
  #allocation1 [shape = 'u32[144,128]{1,0:T(1,128)}', space=vmem, size = 0x12000, scoped, tag = 'internal scratch']
  %s0 = inlined_call_operand.vmem [shape: f32[8,384], index: 0, kind: input, shape index: {}]
  %s1 = inlined_call_operand.vmem [shape: f32[384,16], index: 1, kind: input, shape index: {}]
  %s2 = inlined_call_operand.hbm [shape: f32[8,16], index: 2, kind: output, shape index: {}]
  %s3 = sld [smem:[#allocation0]]
  $region18: #{tpu_custom_call.1} parent=0
    _
  %s5 = ssub.s32 1, %s3
  %s6 = scalar_select 0, %s5, %s3
  $region1: #{tpu_custom_call.1} parent=0
    #allocation2 [shape = 'u8[4096]{0}', space=vmem, size = 0x1000, scoped, tag = 'output window, operand 0, single buffered']
    #allocation3 [shape = 's32[1]{0}', space=sflag, size = 0x4, scoped, tag = 'scoped memory for tpu_custom_call.1']
    %7 = vsyncpa [#allocation3], 0
    // Predicated region
    $region2: #{tpu_custom_call.1} parent=1 // pred_check
      _
    $region3: #{tpu_custom_call.1} parent=1 // pred_check_branch
      %9 = sbr.rel (0) target = $region5
    $region4: #{tpu_custom_call.1} parent=1 // pred_region
      _
    $region5: #{tpu_custom_call.1} parent=1 // pred_fallthru
      _
    // Predicated region
    $region6: #{tpu_custom_call.1} parent=1 // pred_check
      _
    $region7: #{tpu_custom_call.1} parent=1 // pred_check_branch
      %11 = sbr.rel (0) target = $region9
    $region8: #{tpu_custom_call.1} parent=1 // pred_region
      _
    $region9: #{tpu_custom_call.1} parent=1 // pred_fallthru
      _
    %v12 = vld [vmem:[%s1] sm:$0xff]
    %v13 = vld [vmem:[%s1 + $0x8] sm:$0xff]
    %v14 = vld [vmem:[%s1 + $0x10] sm:$0xff]
    %v15 = vld [vmem:[%s1 + $0x18] sm:$0xff]
    %v16 = vld [vmem:[%s1 + $0x20] sm:$0xff]
    %v17 = vld [vmem:[%s1 + $0x28] sm:$0xff]
    %v18 = vld [vmem:[%s1 + $0x30] sm:$0xff]
    %v19 = vld [vmem:[%s1 + $0x38] sm:$0xff]
    %v20 = vld [vmem:[%s1 + $0x40] sm:$0xff]
    %v21 = vld [vmem:[%s1 + $0x48] sm:$0xff]
    %v22 = vld [vmem:[%s1 + $0x50] sm:$0xff]
    %v23 = vld [vmem:[%s1 + $0x58] sm:$0xff]
    %v24 = vld [vmem:[%s1 + $0x60] sm:$0xff]
    %v25 = vld [vmem:[%s1 + $0x68] sm:$0xff]
    %v26 = vld [vmem:[%s1 + $0x70] sm:$0xff]
    %v27 = vld [vmem:[%s1 + $0x78] sm:$0xff]
    %v28 = vld [vmem:[%s1 + $0x80] sm:$0xff]
    %v29 = vld [vmem:[%s1 + $0x88] sm:$0xff]
    %v30 = vld [vmem:[%s1 + $0x90] sm:$0xff]
    %v31 = vld [vmem:[%s1 + $0x98] sm:$0xff]
    %v32 = vld [vmem:[%s1 + $0xa0] sm:$0xff]
    %v33 = vld [vmem:[%s1 + $0xa8] sm:$0xff]
    %v34 = vld [vmem:[%s1 + $0xb0] sm:$0xff]
    %v35 = vld [vmem:[%s1 + $0xb8] sm:$0xff]
    %v36 = vld [vmem:[%s1 + $0xc0] sm:$0xff]
    %v37 = vld [vmem:[%s1 + $0xc8] sm:$0xff]
    %v38 = vld [vmem:[%s1 + $0xd0] sm:$0xff]
    %v39 = vld [vmem:[%s1 + $0xd8] sm:$0xff]
    %v40 = vld [vmem:[%s1 + $0xe0] sm:$0xff]
    %v41 = vld [vmem:[%s1 + $0xe8] sm:$0xff]
    %v42 = vld [vmem:[%s1 + $0xf0] sm:$0xff]
    %v43 = vld [vmem:[%s1 + $0xf8] sm:$0xff]
    %v44 = vld [vmem:[%s1 + $0x100] sm:$0xff]
    %v45 = vld [vmem:[%s1 + $0x108] sm:$0xff]
    %v46 = vld [vmem:[%s1 + $0x110] sm:$0xff]
    %v47 = vld [vmem:[%s1 + $0x118] sm:$0xff]
    %v48 = vld [vmem:[%s1 + $0x120] sm:$0xff]
    %v49 = vld [vmem:[%s1 + $0x128] sm:$0xff]
    %v50 = vld [vmem:[%s1 + $0x130] sm:$0xff]
    %v51 = vld [vmem:[%s1 + $0x138] sm:$0xff]
    %v52 = vld [vmem:[%s1 + $0x140] sm:$0xff]
    %v53 = vld [vmem:[%s1 + $0x148] sm:$0xff]
    %v54 = vld [vmem:[%s1 + $0x150] sm:$0xff]
    %v55 = vld [vmem:[%s1 + $0x158] sm:$0xff]
    %v56 = vld [vmem:[%s1 + $0x160] sm:$0xff]
    %v57 = vld [vmem:[%s1 + $0x168] sm:$0xff]
    %v58 = vld [vmem:[%s1 + $0x170] sm:$0xff]
    %v59 = vld [vmem:[%s1 + $0x178] sm:$0xff]
    %s60 = smul.u32 0, 3
    %s61 = smul.addr %s60, 8
    %s62 = scalar_lea.vmem %s0, %s61
    %v63 = vld [vmem:[%s62] sm:$0xff]
    %v64 = vld [vmem:[%s62 + $0x8] sm:$0xff]
    %v65 = vld [vmem:[%s62 + $0x10] sm:$0xff]
    %v66 = vmul.f32 %v63, %v63
    %v67 = vmul.f32 %v64, %v64
    %v68 = vmul.f32 %v65, %v65
    %69 = vmatprep.subr.mxu0 0.0
    %70 = vmatpush1.msra.mxu0 %v27
    %71 = vmatprep.subr.mxu0 0.0
    %72 = vmatpush1.msra.mxu0 %v26
    %73 = vmatprep.subr.mxu0 0.0
    %74 = vmatpush1.msra.mxu0 %v25
    %75 = vmatprep.subr.mxu0 0.0
    %76 = vmatpush1.msra.mxu0 %v24
    %77 = vmatprep.subr.mxu0 0.0
    %78 = vmatpush1.msra.mxu0 %v23
    %79 = vmatprep.subr.mxu0 0.0
    %80 = vmatpush1.msra.mxu0 %v22
    %81 = vmatprep.subr.mxu0 0.0
    %82 = vmatpush1.msra.mxu0 %v21
    %83 = vmatprep.subr.mxu0 0.0
    %84 = vmatpush1.msra.mxu0 %v20
    %85 = vmatprep.subr.mxu0 0.0
    %86 = vmatpush1.msra.mxu0 %v19
    %87 = vmatprep.subr.mxu0 0.0
    %88 = vmatpush1.msra.mxu0 %v18
    %89 = vmatprep.subr.mxu0 0.0
    %90 = vmatpush1.msra.mxu0 %v17
    %91 = vmatprep.subr.mxu0 0.0
    %92 = vmatpush1.msra.mxu0 %v16
    %93 = vmatprep.subr.mxu0 0.0
    %94 = vmatpush1.msra.mxu0 %v15
    %95 = vmatprep.subr.mxu0 0.0
    %96 = vmatpush1.msra.mxu0 %v14
    %97 = vmatprep.subr.mxu0 0.0
    %98 = vmatpush1.msra.mxu0 %v13
    %99 = vmatprep.subr.mxu0 0.0
    %100 = vmatpush1.msra.mxu0 %v12
    %101 = vmatprep.subr.mxu0 0.0
    %102 = vmatpush2.msra.mxu0 %v43
    %103 = vmatprep.subr.mxu0 0.0
    %104 = vmatpush2.msra.mxu0 %v42
    %105 = vmatprep.subr.mxu0 0.0
    %106 = vmatpush2.msra.mxu0 %v41
    %107 = vmatprep.subr.mxu0 0.0
    %108 = vmatpush2.msra.mxu0 %v40
    %109 = vmatprep.subr.mxu0 0.0
    %110 = vmatpush2.msra.mxu0 %v39
    %111 = vmatprep.subr.mxu0 0.0
    %112 = vmatpush2.msra.mxu0 %v38
    %113 = vmatprep.subr.mxu0 0.0
    %114 = vmatpush2.msra.mxu0 %v37
    %115 = vmatprep.subr.mxu0 0.0
    %116 = vmatpush2.msra.mxu0 %v36
    %117 = vmatprep.subr.mxu0 0.0
    %118 = vmatpush2.msra.mxu0 %v35
    %119 = vmatprep.subr.mxu0 0.0
    %120 = vmatpush2.msra.mxu0 %v34
    %121 = vmatprep.subr.mxu0 0.0
    %122 = vmatpush2.msra.mxu0 %v33
    %123 = vmatprep.subr.mxu0 0.0
    %124 = vmatpush2.msra.mxu0 %v32
    %125 = vmatprep.subr.mxu0 0.0
    %126 = vmatpush2.msra.mxu0 %v31
    %127 = vmatprep.subr.mxu0 0.0
    %128 = vmatpush2.msra.mxu0 %v30
    %129 = vmatprep.subr.mxu0 0.0
    %130 = vmatpush2.msra.mxu0 %v29
    %131 = vmatprep.subr.mxu0 0.0
    %132 = vmatpush2.msra.mxu0 %v28
    %133 = vmatprep.mubr.f32.mxu0 %v67
    %134 = vmatmul.mubr.f32.gmra.mxu0 %v66
    %v135 = vpop.f32.mrf.mxu0
    %v136 = vadd.f32 -19.297709, %v135
    %v137 = vpop.f32.mrf.mxu0
    %138 = vdwg.mxu0
    %139 = vmatprep.subr.mxu0 0.0
    %140 = vmatpush1.msra.mxu0 %v59
    %141 = vmatprep.subr.mxu0 0.0
    %142 = vmatpush1.msra.mxu0 %v58
    %143 = vmatprep.subr.mxu0 0.0
    %144 = vmatpush1.msra.mxu0 %v57
    %145 = vmatprep.subr.mxu0 0.0
    %146 = vmatpush1.msra.mxu0 %v56
    %147 = vmatprep.subr.mxu0 0.0
    %148 = vmatpush1.msra.mxu0 %v55
    %149 = vmatprep.subr.mxu0 0.0
    %150 = vmatpush1.msra.mxu0 %v54
    %151 = vmatprep.subr.mxu0 0.0
    %152 = vmatpush1.msra.mxu0 %v53
    %153 = vmatprep.subr.mxu0 0.0
    %154 = vmatpush1.msra.mxu0 %v52
    %155 = vmatprep.subr.mxu0 0.0
    %156 = vmatpush1.msra.mxu0 %v51
    %157 = vmatprep.subr.mxu0 0.0
    %158 = vmatpush1.msra.mxu0 %v50
    %159 = vmatprep.subr.mxu0 0.0
    %160 = vmatpush1.msra.mxu0 %v49
    %161 = vmatprep.subr.mxu0 0.0
    %162 = vmatpush1.msra.mxu0 %v48
    %163 = vmatprep.subr.mxu0 0.0
    %164 = vmatpush1.msra.mxu0 %v47
    %165 = vmatprep.subr.mxu0 0.0
    %166 = vmatpush1.msra.mxu0 %v46
    %167 = vmatprep.subr.mxu0 0.0
    %168 = vmatpush1.msra.mxu0 %v45
    %169 = vmatprep.subr.mxu0 0.0
    %170 = vmatpush1.msra.mxu0 %v44
    %171 = vmatprep.subr.mxu0 0.0
    %172 = vmatpush2.msra.mxu0 0.0
    %173 = vmatprep.subr.mxu0 0.0
    %174 = vmatpush2.msra.mxu0 0.0
    %175 = vmatprep.subr.mxu0 0.0
    %176 = vmatpush2.msra.mxu0 0.0
    %177 = vmatprep.subr.mxu0 0.0
    %178 = vmatpush2.msra.mxu0 0.0
    %179 = vmatprep.subr.mxu0 0.0
    %180 = vmatpush2.msra.mxu0 0.0
    %181 = vmatprep.subr.mxu0 0.0
    %182 = vmatpush2.msra.mxu0 0.0
    %183 = vmatprep.subr.mxu0 0.0
    %184 = vmatpush2.msra.mxu0 0.0
    %185 = vmatprep.subr.mxu0 0.0
    %186 = vmatpush2.msra.mxu0 0.0
    %187 = vmatprep.subr.mxu0 0.0
    %188 = vmatpush2.msra.mxu0 0.0
    %189 = vmatprep.subr.mxu0 0.0
    %190 = vmatpush2.msra.mxu0 0.0
    %191 = vmatprep.subr.mxu0 0.0
    %192 = vmatpush2.msra.mxu0 0.0
    %193 = vmatprep.subr.mxu0 0.0
    %194 = vmatpush2.msra.mxu0 0.0
    %195 = vmatprep.subr.mxu0 0.0
    %196 = vmatpush2.msra.mxu0 0.0
    %197 = vmatprep.subr.mxu0 0.0
    %198 = vmatpush2.msra.mxu0 0.0
    %199 = vmatprep.subr.mxu0 0.0
    %200 = vmatpush2.msra.mxu0 0.0
    %201 = vmatprep.subr.mxu0 0.0
    %202 = vmatpush2.msra.mxu0 0.0
    %203 = vmatprep.mubr.f32.mxu0 0.0
    %204 = vmatmul.mubr.f32.gmra.mxu0 %v68
    %v205 = vpop.f32.mrf.mxu0
    %v206 = vadd.f32 %v136, %v205
    %v207 = vpop.f32.mrf.mxu0
    %208 = vdwg.mxu0
    %vm209 = vcmask 130048
    %210 = vst.msk [vmem:[#allocation2] sm:$0xff] %vm209, %v206
    // Predicated region
    $region10: #{tpu_custom_call.1} parent=1 // pred_check
      _
    $region11: #{tpu_custom_call.1} parent=1 // pred_check_branch
      %212 = sbr.rel (0) target = $region13
    $region12: #{tpu_custom_call.1} parent=1 // pred_region
      %s214 = ssub.s32 128, 128
      %215 = vsyncadd [#allocation3], %s214
      %s217 = sshll.u32 [#allocation2], 4
      %s218 = int_to_ptr.vmem [resolvable:$true] %s217
      %220 = dma.vmem_to_hbm [thread:$0]  %s218, 128, %s2, [#allocation3]
    $region13: #{tpu_custom_call.1} parent=1 // pred_fallthru
      _
    // Predicated region
    $region14: #{tpu_custom_call.1} parent=1 // pred_check
      _
    $region15: #{tpu_custom_call.1} parent=1 // pred_check_branch
      %222 = sbr.rel (0) target = $region17
    $region16: #{tpu_custom_call.1} parent=1 // pred_region
      %223 = dma.done [#allocation3], 128
    $region17: #{tpu_custom_call.1} parent=1 // pred_fallthru
      _
    %224 = vsyncpa [#allocation3], 1

</llo_original>
